<compile_context>
chip_gen: v7x
topology: tpu7x:2x2x1
jax: 0.10.0
libtpu: 0.0.40
codegen_flags: <defaults>
</compile_context>

<pallas_src>
import math
import functools

import jax
import jax.numpy as jnp
from jax import lax
from jax.experimental import pallas as pl
from jax.experimental.pallas import tpu as pltpu


def _uniform01(shape, seed_u32, salt_i32):
    """Counter-based uniform(0,1) noise in pure jnp (TPU + interpret safe).

    splitmix32-style finalizer over a per-element counter mixed with a per-call
    seed and a per-(tile, draw) salt.  The stream is a pure function of
    (seed, salt, element index), so it is independent of grid execution order.
    """
    rows, cols = shape
    ctr = (lax.broadcasted_iota(jnp.int32, shape, 0) * cols
           + lax.broadcasted_iota(jnp.int32, shape, 1)).astype(jnp.uint32)
    x = (ctr
         + seed_u32 * jnp.uint32(0x9E3779B9)
         + salt_i32.astype(jnp.uint32) * jnp.uint32(0x85EBCA6B))
    x = (x ^ (x >> 16)) * jnp.uint32(0x7FEB352D)
    x = (x ^ (x >> 15)) * jnp.uint32(0x846CA68B)
    x = x ^ (x >> 16)
    # top 24 bits -> strictly inside (0, 1); fits int32/f32 exactly.
    mant = (x >> 8).astype(jnp.int32)
    return (mant.astype(jnp.float32) * jnp.float32(1.0 / (1 << 24))
            + jnp.float32(0.5 / (1 << 24)))


def _argmax_sublanes(v, mx, n_tokens):
    """First-index argmax over the sublane (token) axis given the column max.

    Returns (1, tile) int32.  Tie-break: first maximal index (torch.argmax).
    Uses an f32 min-reduction (indices < 2^24 are exact in f32).
    """
    ids = lax.broadcasted_iota(jnp.int32, v.shape, 0).astype(jnp.float32)
    masked = jnp.where(v == mx, ids, jnp.float32(n_tokens))
    return jnp.min(masked, axis=0, keepdims=True).astype(jnp.int32)


def soft_discretizer_kernel(
    seed_ref,     # (1,) int32           scalar prefetch (SMEM)
    x_ref,        # (dLatent, TILE)      channels on sublanes, spatial on lanes
    wpre_t_ref,   # (nTokens, dLatent)   pre_proj weight, transposed
    bpre_ref,     # (nTokens, 1)
    wfus_t_ref,   # (dLatent, nTokens)   (emb @ w_post)^T
    bpost_ref,    # (dLatent, 1)
    zq_ref,       # (dLatent, TILE)      out
    misc_ref,     # (4, TILE) int32      out: [bitcast(kl), soft, hard, cold]
    *,
    n_tokens,
    inv_tau,
):
    tile = x_ref.shape[-1]
    seed_u = seed_ref[0].astype(jnp.uint32)
    stream = pl.program_id(0) * pl.num_programs(1) + pl.program_id(1)

    # pre_proj (1x1 conv) in transposed layout: (nTok, C) @ (C, tile).
    z = jnp.dot(wpre_t_ref[...], x_ref[...],
                preferred_element_type=jnp.float32) + bpre_ref[...]

    # --- deterministic path: log-softmax, KL, hard tokens --------------------
    m = jnp.max(z, axis=0, keepdims=True)
    hard_idx = _argmax_sublanes(z, m, n_tokens)            # reuses m
    e = jnp.exp(z - m)
    s = jnp.sum(e, axis=0, keepdims=True)
    logp = (z - m) - jnp.log(s)
    p = e / s
    # sum_k p_k == 1  =>  sum p*(logp + logK) == sum p*logp + logK
    kl_row = jnp.sum(p * logp, axis=0, keepdims=True) + math.log(n_tokens)

    # --- cold tokens: Categorical(logits=z).sample() --------------------------
    # Exponential races: argmax_k e_k / E_k, E_k ~ Exp(1); reuses e (one log).
    u_cold = _uniform01((n_tokens, tile), seed_u, 2 * stream)
    r = e / (-jnp.log(u_cold))
    cold_idx = _argmax_sublanes(r, jnp.max(r, axis=0, keepdims=True), n_tokens)

    # --- gumbel-softmax sample (hard=False) and soft tokens -------------------
    u_g = _uniform01((n_tokens, tile), seed_u, 2 * stream + 1)
    zg = z - jnp.log(-jnp.log(u_g))
    mg = jnp.max(zg, axis=0, keepdims=True)
    soft_idx = _argmax_sublanes(zg, mg, n_tokens)          # softmax is monotone
    ey = jnp.exp((zg - mg) * inv_tau)
    y = ey / jnp.sum(ey, axis=0, keepdims=True)            # exact normalization

    # --- epilogue: z_q = (emb @ w_post)^T @ y + b_post ------------------------
    out = jnp.dot(wfus_t_ref[...], y,
                  preferred_element_type=jnp.float32) + bpost_ref[...]
    zq_ref[...] = out.astype(zq_ref.dtype)

    # Lane-dense packed per-position scalars (single int32 output array).
    misc_ref[0:1, :] = lax.bitcast_convert_type(kl_row, jnp.int32)
    misc_ref[1:2, :] = soft_idx
    misc_ref[2:3, :] = hard_idx
    misc_ref[3:4, :] = cold_idx


def soft_discretizer_forward(x, params, key, *, temperature=1.0, kl_weight=1.0,
                             tile=512, vmem_limit_bytes=32 * 1024 * 1024):
    """Eval-style forward of the non-categorical SoftDiscretizer.

    x: (B, dLatent, H, W).  params: w_pre (dLatent,nTokens), b_pre (1,nTokens),
    emb (nTokens,dTokens), w_post (dTokens,dLatent), b_post (1,dLatent).
    Returns (z_q, kl_loss, (soft_tokens, hard_tokens, cold_tokens)).

    tile / vmem_limit_bytes are per-generation knobs: the defaults are safe on
    v5e/v6e/v7x; on v6e raise the limit to 64-96 MiB and sweep tile up to
    1024-2048, on v7x (64 MiB VMEM) keep the defaults.
    """
    B, C, H, W = x.shape
    d_latent = C
    n_tokens = params["w_pre"].shape[1]
    HW = H * W

    # Spatial dim sits on the 128-lane axis; round tiles to lane multiples.
    hw_pad = -(-HW // 128) * 128
    tile = max(128, (min(tile, hw_pad) // 128) * 128)
    hw_pad = -(-HW // tile) * tile
    num_tiles = hw_pad // tile

    # NCHW -> (B, C, H*W) is a free, contiguous reshape (no transpose).
    x_flat = x.reshape(B, C, HW)
    if hw_pad != HW:
        x_flat = jnp.pad(x_flat, ((0, 0), (0, 0), (0, hw_pad - HW)))

    # Transposed weights for the tokens/channels-on-sublanes layout;
    # post_proj folded into the embedding: w_fused = emb @ w_post.
    w_pre_t = jnp.transpose(params["w_pre"])                       # (nTok, C)
    b_pre_t = params["b_pre"].reshape(n_tokens, 1)
    w_fused_t = jnp.transpose(
        jnp.dot(params["emb"], params["w_post"],
                preferred_element_type=jnp.float32))               # (C, nTok)
    b_post_t = params["b_post"].reshape(d_latent, 1)

    # Per-call int32 seed; the kernel derives per-tile streams from it.
    seed = jax.random.randint(key, (1,), 0, jnp.iinfo(jnp.int32).max,
                              dtype=jnp.int32)

    # TODO(synk): froz_tokens (gumbel_softmax at temperature.v1, used only by
    # the only_quantize path of the original module) are not produced.

    kernel = functools.partial(soft_discretizer_kernel,
                               n_tokens=n_tokens, inv_tau=1.0 / temperature)

    out_shapes = (
        jax.ShapeDtypeStruct((B, d_latent, hw_pad), x.dtype),   # z_q, (B,C,HW)
        jax.ShapeDtypeStruct((B, 4, hw_pad), jnp.int32),        # kl + tokens
    )
    in_specs = [
        pl.BlockSpec((None, d_latent, tile), lambda b, i, s: (b, 0, i)),
        pl.BlockSpec(w_pre_t.shape, lambda b, i, s: (0, 0)),
        pl.BlockSpec(b_pre_t.shape, lambda b, i, s: (0, 0)),
        pl.BlockSpec(w_fused_t.shape, lambda b, i, s: (0, 0)),
        pl.BlockSpec(b_post_t.shape, lambda b, i, s: (0, 0)),
    ]
    out_specs = (
        pl.BlockSpec((None, d_latent, tile), lambda b, i, s: (b, 0, i)),
        pl.BlockSpec((None, 4, tile), lambda b, i, s: (b, 0, i)),
    )

    zq_flat, misc = pl.pallas_call(
        kernel,
        out_shape=out_shapes,
        grid_spec=pltpu.PrefetchScalarGridSpec(
            num_scalar_prefetch=1,
            grid=(B, num_tiles),
            in_specs=in_specs,
            out_specs=out_specs,
        ),
        compiler_params=pltpu.CompilerParams(
            dimension_semantics=("parallel", "parallel"),
            vmem_limit_bytes=vmem_limit_bytes,
        ),
    )(seed, x_flat, w_pre_t, b_pre_t, w_fused_t, b_post_t)

    # (B, C, HW) -> NCHW is again a free reshape.
    z_q = zq_flat[:, :, :HW].reshape(B, d_latent, H, W)

    kl_rows = lax.bitcast_convert_type(misc[:, 0, :HW], jnp.float32)
    kl = jnp.sum(kl_rows) / B                  # mean over batch of sum(c,h,w)
    kl_loss = kl_weight * kl * (H * W)         # ratio_weight = H*W per module

    tokens = tuple(misc[:, j, :HW].reshape(-1) for j in (1, 2, 3))
    return z_q, kl_loss, tokens


if __name__ == "__main__":
    key = jax.random.PRNGKey(0)
    B, dLatent, H, W = 2, 8, 16, 16
    nTokens, dTokens = 16, 32

    ks = jax.random.split(key, 7)
    x = jax.random.normal(ks[0], (B, dLatent, H, W), dtype=jnp.float32)

    # Deterministic parameter init (shapes per module __init__; init_emb-style
    # uniform(-1/nTokens, 1/nTokens) for the embedding table).
    params = dict(
        w_pre=0.1 * jax.random.normal(ks[1], (dLatent, nTokens), dtype=jnp.float32),
        b_pre=0.05 * jax.random.normal(ks[2], (1, nTokens), dtype=jnp.float32),
        emb=jax.random.uniform(
            ks[3], (nTokens, dTokens), dtype=jnp.float32,
            minval=-1.0 / nTokens, maxval=1.0 / nTokens),
        w_post=0.1 * jax.random.normal(ks[4], (dTokens, dLatent), dtype=jnp.float32),
        b_post=0.05 * jax.random.normal(ks[5], (1, dLatent), dtype=jnp.float32),
    )

    z_q, kl_loss, tokens = soft_discretizer_forward(
        x, params, ks[6], temperature=1.0, kl_weight=1.0, tile=512)
    jax.block_until_ready((z_q, kl_loss, tokens))

    assert z_q.shape == (B, dLatent, H, W)
    assert all(t.shape == (B * H * W,) for t in tokens)
    assert all(bool(jnp.all((t >= 0) & (t < nTokens))) for t in tokens)
    assert bool(jnp.all(jnp.isfinite(z_q)))
    assert bool(jnp.isfinite(kl_loss))

    # Deterministic-path sanity check against plain JAX (hard tokens + KL).
    z_ref = (jnp.einsum("bchw,cn->bnhw", x, params["w_pre"])
             + params["b_pre"].reshape(1, nTokens, 1, 1))
    logp_ref = jax.nn.log_softmax(z_ref, axis=1)
    p_ref = jnp.exp(logp_ref)
    kl_ref = jnp.mean(jnp.sum(p_ref * (logp_ref + math.log(nTokens)),
                              axis=(1, 2, 3))) * (H * W)
    assert abs(float(kl_loss) - float(kl_ref)) <= 1e-2 + 1e-2 * abs(float(kl_ref)), (
        float(kl_loss), float(kl_ref))
    hard_ref = jnp.argmax(z_ref, axis=1).reshape(-1)
    match = float(jnp.mean((tokens[1] == hard_ref).astype(jnp.float32)))
    assert match > 0.98, match

    print("KERNEL_OK")
</pallas_src>

<mosaic_0001>
module attributes {stable_mosaic.version = 11 : i64} {
  func.func @soft_discretizer_kernel(%arg0: i32, %arg1: i32, %arg2: memref<1xi32, #tpu.memory_space<smem>>, %arg3: memref<1x8x256xf32, #tpu.memory_space<vmem>>, %arg4: memref<16x8xf32, #tpu.memory_space<vmem>>, %arg5: memref<16x1xf32, #tpu.memory_space<vmem>>, %arg6: memref<8x16xf32, #tpu.memory_space<vmem>>, %arg7: memref<8x1xf32, #tpu.memory_space<vmem>>, %arg8: memref<1x8x256xf32, #tpu.memory_space<vmem>>, %arg9: memref<1x4x256xi32, #tpu.memory_space<vmem>>) attributes {dimension_semantics = [#tpu.dimension_semantics<parallel>, #tpu.dimension_semantics<parallel>], iteration_bounds = array<i64: 2, 1>, scalar_prefetch = 1 : i64, scratch_operands = 0 : i64, tpu.core_type = #tpu.core_type<tc>, window_params = [{transform_indices = @transform_0, window_bounds = array<i64: 1, 8, 256>}, {pipeline_mode = #tpu.pipeline_mode<synchronous>, transform_indices = @transform_1, window_bounds = array<i64: 16, 8>}, {pipeline_mode = #tpu.pipeline_mode<synchronous>, transform_indices = @transform_2, window_bounds = array<i64: 16, 1>}, {pipeline_mode = #tpu.pipeline_mode<synchronous>, transform_indices = @transform_3, window_bounds = array<i64: 8, 16>}, {pipeline_mode = #tpu.pipeline_mode<synchronous>, transform_indices = @transform_4, window_bounds = array<i64: 8, 1>}, {transform_indices = @transform_5, window_bounds = array<i64: 1, 8, 256>}, {transform_indices = @transform_6, window_bounds = array<i64: 1, 4, 256>}]} {
    %c0 = arith.constant 0 : index
    %0 = memref.load %arg2[%c0] : memref<1xi32, #tpu.memory_space<smem>>
    %c1_i32 = arith.constant 1 : i32
    %1 = arith.muli %arg0, %c1_i32 : i32
    %2 = arith.addi %1, %arg1 : i32
    %c0_0 = arith.constant 0 : index
    %c0_1 = arith.constant 0 : index
    %3 = vector.load %arg4[%c0_0, %c0_1] : memref<16x8xf32, #tpu.memory_space<vmem>>, vector<16x8xf32>
    %c0_2 = arith.constant 0 : index
    %c0_3 = arith.constant 0 : index
    %c0_4 = arith.constant 0 : index
    %4 = vector.load %arg3[%c0_2, %c0_3, %c0_4] : memref<1x8x256xf32, #tpu.memory_space<vmem>>, vector<1x8x256xf32>
    %5 = vector.shape_cast %4 : vector<1x8x256xf32> to vector<8x256xf32>
    %cst = arith.constant dense<0.000000e+00> : vector<16x256xf32>
    %6 = tpu.matmul %3, %5, %cst {dimension_numbers = #tpu.dot_dimension_numbers<[1], [0], [0], [1], [0, 0, 1, 1], [], []>} : vector<16x8xf32>, vector<8x256xf32>, vector<16x256xf32> -> vector<16x256xf32>
    %c0_5 = arith.constant 0 : index
    %c0_6 = arith.constant 0 : index
    %7 = vector.load %arg5[%c0_5, %c0_6] : memref<16x1xf32, #tpu.memory_space<vmem>>, vector<16x1xf32>
    %8 = vector.broadcast %7 : vector<16x1xf32> to vector<16x256xf32>
    %9 = arith.addf %6, %8 : vector<16x256xf32>
    %cst_7 = arith.constant dense<0xFF800000> : vector<256xf32>
    %10 = vector.multi_reduction <maximumf>, %9, %cst_7 [0] : vector<16x256xf32> to vector<256xf32>
    %11 = vector.shape_cast %10 : vector<256xf32> to vector<1x256xf32>
    %12 = tpu.iota {dimensions = array<i32: 0>} : vector<16x256xi32>
    %13 = arith.sitofp %12 : vector<16x256xi32> to vector<16x256xf32>
    %14 = vector.broadcast %11 : vector<1x256xf32> to vector<16x256xf32>
    %15 = arith.cmpf oeq, %9, %14 : vector<16x256xf32>
    %cst_8 = arith.constant 1.600000e+01 : f32
    %16 = vector.broadcast %cst_8 : f32 to vector<16x256xf32>
    %17 = arith.select %15, %13, %16 : vector<16x256xi1>, vector<16x256xf32>
    %cst_9 = arith.constant dense<0x7F800000> : vector<256xf32>
    %18 = vector.multi_reduction <minimumf>, %17, %cst_9 [0] : vector<16x256xf32> to vector<256xf32>
    %19 = vector.shape_cast %18 : vector<256xf32> to vector<1x256xf32>
    %20 = arith.fptosi %19 : vector<1x256xf32> to vector<1x256xi32>
    %21 = vector.broadcast %11 : vector<1x256xf32> to vector<16x256xf32>
    %22 = arith.subf %9, %21 : vector<16x256xf32>
    %23 = math.exp %22 : vector<16x256xf32>
    %cst_10 = arith.constant dense<0.000000e+00> : vector<256xf32>
    %24 = vector.multi_reduction <add>, %23, %cst_10 [0] : vector<16x256xf32> to vector<256xf32>
    %25 = vector.shape_cast %24 : vector<256xf32> to vector<1x256xf32>
    %26 = vector.broadcast %11 : vector<1x256xf32> to vector<16x256xf32>
    %27 = arith.subf %9, %26 : vector<16x256xf32>
    %28 = math.log %25 : vector<1x256xf32>
    %29 = vector.broadcast %28 : vector<1x256xf32> to vector<16x256xf32>
    %30 = arith.subf %27, %29 : vector<16x256xf32>
    %31 = vector.broadcast %25 : vector<1x256xf32> to vector<16x256xf32>
    %32 = arith.divf %23, %31 : vector<16x256xf32>
    %33 = arith.mulf %32, %30 : vector<16x256xf32>
    %cst_11 = arith.constant dense<0.000000e+00> : vector<256xf32>
    %34 = vector.multi_reduction <add>, %33, %cst_11 [0] : vector<16x256xf32> to vector<256xf32>
    %35 = vector.shape_cast %34 : vector<256xf32> to vector<1x256xf32>
    %cst_12 = arith.constant 2.77258873 : f32
    %36 = vector.broadcast %cst_12 : f32 to vector<1x256xf32>
    %37 = arith.addf %35, %36 : vector<1x256xf32>
    %c2_i32 = arith.constant 2 : i32
    %38 = arith.muli %c2_i32, %2 : i32
    %39 = tpu.iota {dimensions = array<i32: 0>} : vector<16x256xi32>
    %c256_i32 = arith.constant 256 : i32
    %40 = vector.broadcast %c256_i32 : i32 to vector<16x256xi32>
    %41 = arith.muli %39, %40 : vector<16x256xi32>
    %42 = tpu.iota {dimensions = array<i32: 1>} : vector<16x256xi32>
    %43 = arith.addi %41, %42 : vector<16x256xi32>
    %c-1640531527_i32 = arith.constant -1640531527 : i32
    %44 = arith.muli %0, %c-1640531527_i32 : i32
    %45 = vector.broadcast %44 : i32 to vector<16x256xi32>
    %46 = arith.addi %43, %45 : vector<16x256xi32>
    %c-2048144789_i32 = arith.constant -2048144789 : i32
    %47 = arith.muli %38, %c-2048144789_i32 : i32
    %48 = vector.broadcast %47 : i32 to vector<16x256xi32>
    %49 = arith.addi %46, %48 : vector<16x256xi32>
    %c16_i32 = arith.constant 16 : i32
    %50 = vector.broadcast %c16_i32 : i32 to vector<16x256xi32>
    %51 = arith.shrui %49, %50 : vector<16x256xi32>
    %52 = arith.xori %49, %51 : vector<16x256xi32>
    %c2146121005_i32 = arith.constant 2146121005 : i32
    %53 = vector.broadcast %c2146121005_i32 : i32 to vector<16x256xi32>
    %54 = arith.muli %52, %53 : vector<16x256xi32>
    %c15_i32 = arith.constant 15 : i32
    %55 = vector.broadcast %c15_i32 : i32 to vector<16x256xi32>
    %56 = arith.shrui %54, %55 : vector<16x256xi32>
    %57 = arith.xori %54, %56 : vector<16x256xi32>
    %c-2073254261_i32 = arith.constant -2073254261 : i32
    %58 = vector.broadcast %c-2073254261_i32 : i32 to vector<16x256xi32>
    %59 = arith.muli %57, %58 : vector<16x256xi32>
    %c16_i32_13 = arith.constant 16 : i32
    %60 = vector.broadcast %c16_i32_13 : i32 to vector<16x256xi32>
    %61 = arith.shrui %59, %60 : vector<16x256xi32>
    %62 = arith.xori %59, %61 : vector<16x256xi32>
    %c8_i32 = arith.constant 8 : i32
    %63 = vector.broadcast %c8_i32 : i32 to vector<16x256xi32>
    %64 = arith.shrui %62, %63 : vector<16x256xi32>
    %65 = arith.sitofp %64 : vector<16x256xi32> to vector<16x256xf32>
    %cst_14 = arith.constant 5.96046448E-8 : f32
    %66 = vector.broadcast %cst_14 : f32 to vector<16x256xf32>
    %67 = arith.mulf %65, %66 : vector<16x256xf32>
    %cst_15 = arith.constant 2.98023224E-8 : f32
    %68 = vector.broadcast %cst_15 : f32 to vector<16x256xf32>
    %69 = arith.addf %67, %68 : vector<16x256xf32>
    %70 = math.log %69 : vector<16x256xf32>
    %cst_16 = arith.constant 0.000000e+00 : f32
    %71 = vector.broadcast %cst_16 : f32 to vector<16x256xf32>
    %72 = arith.subf %71, %70 : vector<16x256xf32>
    %73 = arith.divf %23, %72 : vector<16x256xf32>
    %cst_17 = arith.constant dense<0xFF800000> : vector<256xf32>
    %74 = vector.multi_reduction <maximumf>, %73, %cst_17 [0] : vector<16x256xf32> to vector<256xf32>
    %75 = vector.shape_cast %74 : vector<256xf32> to vector<1x256xf32>
    %76 = tpu.iota {dimensions = array<i32: 0>} : vector<16x256xi32>
    %77 = arith.sitofp %76 : vector<16x256xi32> to vector<16x256xf32>
    %78 = vector.broadcast %75 : vector<1x256xf32> to vector<16x256xf32>
    %79 = arith.cmpf oeq, %73, %78 : vector<16x256xf32>
    %cst_18 = arith.constant 1.600000e+01 : f32
    %80 = vector.broadcast %cst_18 : f32 to vector<16x256xf32>
    %81 = arith.select %79, %77, %80 : vector<16x256xi1>, vector<16x256xf32>
    %cst_19 = arith.constant dense<0x7F800000> : vector<256xf32>
    %82 = vector.multi_reduction <minimumf>, %81, %cst_19 [0] : vector<16x256xf32> to vector<256xf32>
    %83 = vector.shape_cast %82 : vector<256xf32> to vector<1x256xf32>
    %84 = arith.fptosi %83 : vector<1x256xf32> to vector<1x256xi32>
    %c2_i32_20 = arith.constant 2 : i32
    %85 = arith.muli %c2_i32_20, %2 : i32
    %c1_i32_21 = arith.constant 1 : i32
    %86 = arith.addi %85, %c1_i32_21 : i32
    %87 = tpu.iota {dimensions = array<i32: 0>} : vector<16x256xi32>
    %c256_i32_22 = arith.constant 256 : i32
    %88 = vector.broadcast %c256_i32_22 : i32 to vector<16x256xi32>
    %89 = arith.muli %87, %88 : vector<16x256xi32>
    %90 = tpu.iota {dimensions = array<i32: 1>} : vector<16x256xi32>
    %91 = arith.addi %89, %90 : vector<16x256xi32>
    %c-1640531527_i32_23 = arith.constant -1640531527 : i32
    %92 = arith.muli %0, %c-1640531527_i32_23 : i32
    %93 = vector.broadcast %92 : i32 to vector<16x256xi32>
    %94 = arith.addi %91, %93 : vector<16x256xi32>
    %c-2048144789_i32_24 = arith.constant -2048144789 : i32
    %95 = arith.muli %86, %c-2048144789_i32_24 : i32
    %96 = vector.broadcast %95 : i32 to vector<16x256xi32>
    %97 = arith.addi %94, %96 : vector<16x256xi32>
    %c16_i32_25 = arith.constant 16 : i32
    %98 = vector.broadcast %c16_i32_25 : i32 to vector<16x256xi32>
    %99 = arith.shrui %97, %98 : vector<16x256xi32>
    %100 = arith.xori %97, %99 : vector<16x256xi32>
    %c2146121005_i32_26 = arith.constant 2146121005 : i32
    %101 = vector.broadcast %c2146121005_i32_26 : i32 to vector<16x256xi32>
    %102 = arith.muli %100, %101 : vector<16x256xi32>
    %c15_i32_27 = arith.constant 15 : i32
    %103 = vector.broadcast %c15_i32_27 : i32 to vector<16x256xi32>
    %104 = arith.shrui %102, %103 : vector<16x256xi32>
    %105 = arith.xori %102, %104 : vector<16x256xi32>
    %c-2073254261_i32_28 = arith.constant -2073254261 : i32
    %106 = vector.broadcast %c-2073254261_i32_28 : i32 to vector<16x256xi32>
    %107 = arith.muli %105, %106 : vector<16x256xi32>
    %c16_i32_29 = arith.constant 16 : i32
    %108 = vector.broadcast %c16_i32_29 : i32 to vector<16x256xi32>
    %109 = arith.shrui %107, %108 : vector<16x256xi32>
    %110 = arith.xori %107, %109 : vector<16x256xi32>
    %c8_i32_30 = arith.constant 8 : i32
    %111 = vector.broadcast %c8_i32_30 : i32 to vector<16x256xi32>
    %112 = arith.shrui %110, %111 : vector<16x256xi32>
    %113 = arith.sitofp %112 : vector<16x256xi32> to vector<16x256xf32>
    %cst_31 = arith.constant 5.96046448E-8 : f32
    %114 = vector.broadcast %cst_31 : f32 to vector<16x256xf32>
    %115 = arith.mulf %113, %114 : vector<16x256xf32>
    %cst_32 = arith.constant 2.98023224E-8 : f32
    %116 = vector.broadcast %cst_32 : f32 to vector<16x256xf32>
    %117 = arith.addf %115, %116 : vector<16x256xf32>
    %118 = math.log %117 : vector<16x256xf32>
    %cst_33 = arith.constant 0.000000e+00 : f32
    %119 = vector.broadcast %cst_33 : f32 to vector<16x256xf32>
    %120 = arith.subf %119, %118 : vector<16x256xf32>
    %121 = math.log %120 : vector<16x256xf32>
    %122 = arith.subf %9, %121 : vector<16x256xf32>
    %cst_34 = arith.constant dense<0xFF800000> : vector<256xf32>
    %123 = vector.multi_reduction <maximumf>, %122, %cst_34 [0] : vector<16x256xf32> to vector<256xf32>
    %124 = vector.shape_cast %123 : vector<256xf32> to vector<1x256xf32>
    %125 = tpu.iota {dimensions = array<i32: 0>} : vector<16x256xi32>
    %126 = arith.sitofp %125 : vector<16x256xi32> to vector<16x256xf32>
    %127 = vector.broadcast %124 : vector<1x256xf32> to vector<16x256xf32>
    %128 = arith.cmpf oeq, %122, %127 : vector<16x256xf32>
    %cst_35 = arith.constant 1.600000e+01 : f32
    %129 = vector.broadcast %cst_35 : f32 to vector<16x256xf32>
    %130 = arith.select %128, %126, %129 : vector<16x256xi1>, vector<16x256xf32>
    %cst_36 = arith.constant dense<0x7F800000> : vector<256xf32>
    %131 = vector.multi_reduction <minimumf>, %130, %cst_36 [0] : vector<16x256xf32> to vector<256xf32>
    %132 = vector.shape_cast %131 : vector<256xf32> to vector<1x256xf32>
    %133 = arith.fptosi %132 : vector<1x256xf32> to vector<1x256xi32>
    %134 = vector.broadcast %124 : vector<1x256xf32> to vector<16x256xf32>
    %135 = arith.subf %122, %134 : vector<16x256xf32>
    %cst_37 = arith.constant 1.000000e+00 : f32
    %136 = vector.broadcast %cst_37 : f32 to vector<16x256xf32>
    %137 = arith.mulf %135, %136 : vector<16x256xf32>
    %138 = math.exp %137 : vector<16x256xf32>
    %cst_38 = arith.constant dense<0.000000e+00> : vector<256xf32>
    %139 = vector.multi_reduction <add>, %138, %cst_38 [0] : vector<16x256xf32> to vector<256xf32>
    %140 = vector.shape_cast %139 : vector<256xf32> to vector<1x256xf32>
    %141 = vector.broadcast %140 : vector<1x256xf32> to vector<16x256xf32>
    %142 = arith.divf %138, %141 : vector<16x256xf32>
    %c0_39 = arith.constant 0 : index
    %c0_40 = arith.constant 0 : index
    %143 = vector.load %arg6[%c0_39, %c0_40] : memref<8x16xf32, #tpu.memory_space<vmem>>, vector<8x16xf32>
    %cst_41 = arith.constant dense<0.000000e+00> : vector<8x256xf32>
    %144 = tpu.matmul %143, %142, %cst_41 {dimension_numbers = #tpu.dot_dimension_numbers<[1], [0], [0], [1], [0, 0, 1, 1], [], []>} : vector<8x16xf32>, vector<16x256xf32>, vector<8x256xf32> -> vector<8x256xf32>
    %c0_42 = arith.constant 0 : index
    %c0_43 = arith.constant 0 : index
    %145 = vector.load %arg7[%c0_42, %c0_43] : memref<8x1xf32, #tpu.memory_space<vmem>>, vector<8x1xf32>
    %146 = vector.broadcast %145 : vector<8x1xf32> to vector<8x256xf32>
    %147 = arith.addf %144, %146 : vector<8x256xf32>
    %c0_44 = arith.constant 0 : index
    %c0_45 = arith.constant 0 : index
    %c0_46 = arith.constant 0 : index
    %148 = vector.load %arg8[%c0_44, %c0_45, %c0_46] : memref<1x8x256xf32, #tpu.memory_space<vmem>>, vector<1x8x256xf32>
    %149 = vector.shape_cast %148 : vector<1x8x256xf32> to vector<8x256xf32>
    %150 = vector.shape_cast %147 : vector<8x256xf32> to vector<1x8x256xf32>
    tpu.vector_store %arg8[%c0_44, %c0_45, %c0_46], %150 {strides = array<i32>} : memref<1x8x256xf32, #tpu.memory_space<vmem>>, vector<1x8x256xf32>,
    %151 = tpu.bitcast %37 : vector<1x256xf32> -> vector<1x256xi32>
    %c0_47 = arith.constant 0 : index
    %c0_48 = arith.constant 0 : index
    %c0_49 = arith.constant 0 : index
    %152 = vector.load %arg9[%c0_47, %c0_48, %c0_49] : memref<1x4x256xi32, #tpu.memory_space<vmem>>, vector<1x1x256xi32>
    %153 = vector.shape_cast %152 : vector<1x1x256xi32> to vector<1x256xi32>
    %154 = vector.shape_cast %151 : vector<1x256xi32> to vector<1x1x256xi32>
    tpu.vector_store %arg9[%c0_47, %c0_48, %c0_49], %154 {strides = array<i32>} : memref<1x4x256xi32, #tpu.memory_space<vmem>>, vector<1x1x256xi32>,
    %c0_50 = arith.constant 0 : index
    %c1 = arith.constant 1 : index
    %c0_51 = arith.constant 0 : index
    %155 = vector.load %arg9[%c0_50, %c1, %c0_51] : memref<1x4x256xi32, #tpu.memory_space<vmem>>, vector<1x1x256xi32>
    %156 = vector.shape_cast %155 : vector<1x1x256xi32> to vector<1x256xi32>
    %157 = vector.shape_cast %133 : vector<1x256xi32> to vector<1x1x256xi32>
    tpu.vector_store %arg9[%c0_50, %c1, %c0_51], %157 {strides = array<i32>} : memref<1x4x256xi32, #tpu.memory_space<vmem>>, vector<1x1x256xi32>,
    %c0_52 = arith.constant 0 : index
    %c2 = arith.constant 2 : index
    %c0_53 = arith.constant 0 : index
    %158 = vector.load %arg9[%c0_52, %c2, %c0_53] : memref<1x4x256xi32, #tpu.memory_space<vmem>>, vector<1x1x256xi32>
    %159 = vector.shape_cast %158 : vector<1x1x256xi32> to vector<1x256xi32>
    %160 = vector.shape_cast %20 : vector<1x256xi32> to vector<1x1x256xi32>
    tpu.vector_store %arg9[%c0_52, %c2, %c0_53], %160 {strides = array<i32>} : memref<1x4x256xi32, #tpu.memory_space<vmem>>, vector<1x1x256xi32>,
    %c0_54 = arith.constant 0 : index
    %c3 = arith.constant 3 : index
    %c0_55 = arith.constant 0 : index
    %161 = vector.load %arg9[%c0_54, %c3, %c0_55] : memref<1x4x256xi32, #tpu.memory_space<vmem>>, vector<1x1x256xi32>
    %162 = vector.shape_cast %161 : vector<1x1x256xi32> to vector<1x256xi32>
    %163 = vector.shape_cast %84 : vector<1x256xi32> to vector<1x1x256xi32>
    tpu.vector_store %arg9[%c0_54, %c3, %c0_55], %163 {strides = array<i32>} : memref<1x4x256xi32, #tpu.memory_space<vmem>>, vector<1x1x256xi32>,
    return
  }
  func.func @transform_0(%arg0: i32, %arg1: i32, %arg2: memref<1xi32, #tpu.memory_space<smem>>) -> (i32, i32, i32) {
    %c0_i32 = arith.constant 0 : i32
    %c0_i32_0 = arith.constant 0 : i32
    return %arg0, %c0_i32, %arg1 : i32, i32, i32
  }
  func.func @transform_1(%arg0: i32, %arg1: i32, %arg2: memref<1xi32, #tpu.memory_space<smem>>) -> (i32, i32) {
    %c0_i32 = arith.constant 0 : i32
    %c0_i32_0 = arith.constant 0 : i32
    %c0_i32_1 = arith.constant 0 : i32
    return %c0_i32, %c0_i32_0 : i32, i32
  }
  func.func @transform_2(%arg0: i32, %arg1: i32, %arg2: memref<1xi32, #tpu.memory_space<smem>>) -> (i32, i32) {
    %c0_i32 = arith.constant 0 : i32
    %c0_i32_0 = arith.constant 0 : i32
    %c0_i32_1 = arith.constant 0 : i32
    return %c0_i32, %c0_i32_0 : i32, i32
  }
  func.func @transform_3(%arg0: i32, %arg1: i32, %arg2: memref<1xi32, #tpu.memory_space<smem>>) -> (i32, i32) {
    %c0_i32 = arith.constant 0 : i32
    %c0_i32_0 = arith.constant 0 : i32
    %c0_i32_1 = arith.constant 0 : i32
    return %c0_i32, %c0_i32_0 : i32, i32
  }
  func.func @transform_4(%arg0: i32, %arg1: i32, %arg2: memref<1xi32, #tpu.memory_space<smem>>) -> (i32, i32) {
    %c0_i32 = arith.constant 0 : i32
    %c0_i32_0 = arith.constant 0 : i32
    %c0_i32_1 = arith.constant 0 : i32
    return %c0_i32, %c0_i32_0 : i32, i32
  }
  func.func @transform_5(%arg0: i32, %arg1: i32, %arg2: memref<1xi32, #tpu.memory_space<smem>>) -> (i32, i32, i32) {
    %c0_i32 = arith.constant 0 : i32
    %c0_i32_0 = arith.constant 0 : i32
    return %arg0, %c0_i32, %arg1 : i32, i32, i32
  }
  func.func @transform_6(%arg0: i32, %arg1: i32, %arg2: memref<1xi32, #tpu.memory_space<smem>>) -> (i32, i32, i32) {
    %c0_i32 = arith.constant 0 : i32
    %c0_i32_0 = arith.constant 0 : i32
    return %arg0, %c0_i32, %arg1 : i32, i32, i32
  }
}

</mosaic_0001>

<llo_original>
// kernel: tpu_custom_call.1
$region0: #{tpu_custom_call.1}
  #allocation0 [shape = 'u32[]', space=smem, size = 0x4, offset = 0x4, fixed_abs, tag = 'smem constant byte address 0x4 - core index']
  #allocation1 [shape = 'u32[144,128]{1,0:T(1,128)}', space=vmem, size = 0x12000, scoped, tag = 'internal scratch']
  #allocation2 [shape = 's32[1]{0}', space=sflag, size = 0x4, scoped, tag = 'scoped memory for tpu_custom_call.1']
  #allocation3 [shape = 's32[1]{0:T(128)S(6)}', space=smem, size = 0x200, scoped, tag = 'prefetched SMEM operand 0']
  %s0 = inlined_call_operand.<no memory space> [shape: s32[1], index: 0, kind: input, shape index: {}]
  %s1 = inlined_call_operand.vmem [shape: f32[2,8,256], index: 1, kind: input, shape index: {}]
  %s2 = inlined_call_operand.vmem [shape: f32[16,8], index: 2, kind: input, shape index: {}]
  %s3 = inlined_call_operand.vmem [shape: f32[16,1], index: 3, kind: input, shape index: {}]
  %s4 = inlined_call_operand.vmem [shape: f32[8,16], index: 4, kind: input, shape index: {}]
  %s5 = inlined_call_operand.vmem [shape: f32[8,1], index: 5, kind: input, shape index: {}]
  %s6 = inlined_call_operand.hbm [shape: f32[2,8,256], index: 6, kind: output, shape index: {0}]
  %s7 = inlined_call_operand.hbm [shape: s32[2,4,256], index: 7, kind: output, shape index: {1}]
  %8 = xla_tuple %s6, %s7
  %s9 = sld [smem:[#allocation0]]
  $region61: #{tpu_custom_call.1} parent=0
    _
  %s11 = ssub.s32 1, %s9
  %s12 = scalar_select 0, %s11, %s9
  %13 = sst [smem:[#allocation3]] %s0
  $region1: #{tpu_custom_call.1} parent=0
    #allocation4 [shape = 'u8[16384]{0}', space=vmem, size = 0x4000, scoped, tag = 'output window, operand 0']
    #allocation5 [shape = 's32[2]{0}', space=sflag, size = 0x8, scoped, tag = 'scoped memory for tpu_custom_call.1']
    #allocation6 [shape = 'u8[8192]{0}', space=vmem, size = 0x2000, scoped, tag = 'output window, operand 1']
    #allocation7 [shape = 's32[2]{0}', space=sflag, size = 0x8, scoped, tag = 'scoped memory for tpu_custom_call.1']
    %14 = vsyncpa [#allocation5], 0
    %s15 = scalar_lea.sflag [#allocation5], 1
    %16 = vsyncpa %s15, 0
    %17 = vsyncpa [#allocation7], 0
    %s18 = scalar_lea.sflag [#allocation7], 1
    %19 = vsyncpa %s18, 0
    loop: start=0, step=1, limit=4
    $region2: #{tpu_custom_call.1} parent=1 // loop_pre_header
      _
    $region3: #{tpu_custom_call.1} parent=1 // loop_header
      %s21 = sphi 0, %s25
      %p22 = scmp.ge.s32.totalorder %s21, 4
      %s28 = sphi 0, %s40
      %s29 = sphi 0, %s36
      %s30 = sphi 0, %s28
      %s31 = sphi 0, %s29
      %s32 = sphi 0, %s30
      %s33 = sphi 0, %s31
      %s45 = sphi 0, %s47
      %s48 = sphi 0, %s45
      %s49 = sphi 0, %s48
      %s65 = sphi 0, %s49
      %s69 = sphi 0, %s69
      %s71 = sphi 0, %s69
      %s72 = sphi 0, %s71
      %s86 = sphi 0, %s72
      %s90 = sphi 0, %s90
      %s92 = sphi 0, %s90
      %s93 = sphi 0, %s92
      %s107 = sphi 0, %s93
      %s111 = sphi 0, %s111
      %s113 = sphi 0, %s111
      %s114 = sphi 0, %s113
      %s128 = sphi 0, %s114
      %s132 = sphi 0, %s132
      %s134 = sphi 0, %s132
      %s135 = sphi 0, %s134
      %s149 = sphi 0, %s135
      %s157 = sphi 0, %s159
      %s160 = sphi 0, %s157
      %s161 = sphi 0, %s160
      %s177 = sphi 0, %s161
      %s185 = sphi 0, %s187
      %s188 = sphi 0, %s185
      %s189 = sphi 0, %s188
      %s205 = sphi 0, %s189
    $region4: #{tpu_custom_call.1} parent=1 // loop_header_branch
      %24 = sbr.rel (%p22) target = $region8
    $region5: #{tpu_custom_call.1} parent=1 // loop_body
      %s26 = ssub.s32 %s21, 1
      %s27 = ssub.s32 %s21, 2
      %s34 = sadd.s32 1, %s29
      %p35 = scmp.ge.s32.totalorder %s34, 1
      %s36 = scalar_select %p35, 0, %s34
      %s37 = sadd.s32 1, %s28
      %s38 = scalar_select %p35, %s37, %s28
      %p39 = scmp.ge.s32.totalorder %s38, 2
      %s40 = scalar_select %p39, 0, %s38
      %s41 = ssub.s32 %s28, %s40
      %s42 = ssub.s32 %s29, %s36
      %s43 = sor.u32 %s41, %s42
      %p44 = scmp.eq.s32.totalorder %s43, 0
      %s46 = sadd.s32 %s45, 1
      %s47 = scalar_select %p44, %s45, %s46
      %p50 = pneg %p44
      %p51 = scmp.eq.s32.totalorder %s21, 1
      %p52 = por %p50, %p51
      %p53 = scmp.ne.s32.totalorder %s45, %s48
      %p54 = scmp.eq.s32.totalorder %s21, 0
      %p55 = por %p53, %p54
      %p56 = scmp.ne.s32.totalorder %s45, %s48
      %p57 = scmp.eq.s32.totalorder %s26, 1
      %p58 = por %p56, %p57
      %p59 = scmp.ne.s32.totalorder %s48, %s49
      %p60 = scmp.eq.s32.totalorder %s26, 0
      %p61 = por %p59, %p60
      %p62 = scmp.ne.s32.totalorder %s48, %s49
      %p63 = scmp.eq.s32.totalorder %s27, 1
      %p64 = por %p62, %p63
      %p66 = scmp.ne.s32.totalorder %s49, %s65
      %p67 = scmp.eq.s32.totalorder %s27, 0
      %p68 = por %p66, %p67
      %s70 = sadd.s32 %s69, 1
      %p73 = scmp.eq.s32.totalorder %s21, 1
      %p74 = scmp.ne.s32.totalorder %s69, %s71
      %p75 = scmp.eq.s32.totalorder %s21, 0
      %p76 = por %p74, %p75
      %p77 = scmp.ne.s32.totalorder %s69, %s71
      %p78 = scmp.eq.s32.totalorder %s26, 1
      %p79 = por %p77, %p78
      %p80 = scmp.ne.s32.totalorder %s71, %s72
      %p81 = scmp.eq.s32.totalorder %s26, 0
      %p82 = por %p80, %p81
      %p83 = scmp.ne.s32.totalorder %s71, %s72
      %p84 = scmp.eq.s32.totalorder %s27, 1
      %p85 = por %p83, %p84
      %p87 = scmp.ne.s32.totalorder %s72, %s86
      %p88 = scmp.eq.s32.totalorder %s27, 0
      %p89 = por %p87, %p88
      %s91 = sadd.s32 %s90, 1
      %p94 = scmp.eq.s32.totalorder %s21, 1
      %p95 = scmp.ne.s32.totalorder %s90, %s92
      %p96 = scmp.eq.s32.totalorder %s21, 0
      %p97 = por %p95, %p96
      %p98 = scmp.ne.s32.totalorder %s90, %s92
      %p99 = scmp.eq.s32.totalorder %s26, 1
      %p100 = por %p98, %p99
      %p101 = scmp.ne.s32.totalorder %s92, %s93
      %p102 = scmp.eq.s32.totalorder %s26, 0
      %p103 = por %p101, %p102
      %p104 = scmp.ne.s32.totalorder %s92, %s93
      %p105 = scmp.eq.s32.totalorder %s27, 1
      %p106 = por %p104, %p105
      %p108 = scmp.ne.s32.totalorder %s93, %s107
      %p109 = scmp.eq.s32.totalorder %s27, 0
      %p110 = por %p108, %p109
      %s112 = sadd.s32 %s111, 1
      %p115 = scmp.eq.s32.totalorder %s21, 1
      %p116 = scmp.ne.s32.totalorder %s111, %s113
      %p117 = scmp.eq.s32.totalorder %s21, 0
      %p118 = por %p116, %p117
      %p119 = scmp.ne.s32.totalorder %s111, %s113
      %p120 = scmp.eq.s32.totalorder %s26, 1
      %p121 = por %p119, %p120
      %p122 = scmp.ne.s32.totalorder %s113, %s114
      %p123 = scmp.eq.s32.totalorder %s26, 0
      %p124 = por %p122, %p123
      %p125 = scmp.ne.s32.totalorder %s113, %s114
      %p126 = scmp.eq.s32.totalorder %s27, 1
      %p127 = por %p125, %p126
      %p129 = scmp.ne.s32.totalorder %s114, %s128
      %p130 = scmp.eq.s32.totalorder %s27, 0
      %p131 = por %p129, %p130
      %s133 = sadd.s32 %s132, 1
      %p136 = scmp.eq.s32.totalorder %s21, 1
      %p137 = scmp.ne.s32.totalorder %s132, %s134
      %p138 = scmp.eq.s32.totalorder %s21, 0
      %p139 = por %p137, %p138
      %p140 = scmp.ne.s32.totalorder %s132, %s134
      %p141 = scmp.eq.s32.totalorder %s26, 1
      %p142 = por %p140, %p141
      %p143 = scmp.ne.s32.totalorder %s134, %s135
      %p144 = scmp.eq.s32.totalorder %s26, 0
      %p145 = por %p143, %p144
      %p146 = scmp.ne.s32.totalorder %s134, %s135
      %p147 = scmp.eq.s32.totalorder %s27, 1
      %p148 = por %p146, %p147
      %p150 = scmp.ne.s32.totalorder %s135, %s149
      %p151 = scmp.eq.s32.totalorder %s27, 0
      %p152 = por %p150, %p151
      %s153 = ssub.s32 %s28, %s40
      %s154 = ssub.s32 %s29, %s36
      %s155 = sor.u32 %s153, %s154
      %p156 = scmp.eq.s32.totalorder %s155, 0
      %s158 = sadd.s32 %s157, 1
      %s159 = scalar_select %p156, %s157, %s158
      %p162 = pneg %p156
      %p163 = scmp.eq.s32.totalorder %s21, 1
      %p164 = por %p162, %p163
      %p165 = scmp.ne.s32.totalorder %s157, %s160
      %p166 = scmp.eq.s32.totalorder %s21, 0
      %p167 = por %p165, %p166
      %p168 = scmp.ne.s32.totalorder %s157, %s160
      %p169 = scmp.eq.s32.totalorder %s26, 1
      %p170 = por %p168, %p169
      %p171 = scmp.ne.s32.totalorder %s160, %s161
      %p172 = scmp.eq.s32.totalorder %s26, 0
      %p173 = por %p171, %p172
      %p174 = scmp.ne.s32.totalorder %s160, %s161
      %p175 = scmp.eq.s32.totalorder %s27, 1
      %p176 = por %p174, %p175
      %p178 = scmp.ne.s32.totalorder %s161, %s177
      %p179 = scmp.eq.s32.totalorder %s27, 0
      %p180 = por %p178, %p179
      %s181 = ssub.s32 %s28, %s40
      %s182 = ssub.s32 %s29, %s36
      %s183 = sor.u32 %s181, %s182
      %p184 = scmp.eq.s32.totalorder %s183, 0
      %s186 = sadd.s32 %s185, 1
      %s187 = scalar_select %p184, %s185, %s186
      %p190 = pneg %p184
      %p191 = scmp.eq.s32.totalorder %s21, 1
      %p192 = por %p190, %p191
      %p193 = scmp.ne.s32.totalorder %s185, %s188
      %p194 = scmp.eq.s32.totalorder %s21, 0
      %p195 = por %p193, %p194
      %p196 = scmp.ne.s32.totalorder %s185, %s188
      %p197 = scmp.eq.s32.totalorder %s26, 1
      %p198 = por %p196, %p197
      %p199 = scmp.ne.s32.totalorder %s188, %s189
      %p200 = scmp.eq.s32.totalorder %s26, 0
      %p201 = por %p199, %p200
      %p202 = scmp.ne.s32.totalorder %s188, %s189
      %p203 = scmp.eq.s32.totalorder %s27, 1
      %p204 = por %p202, %p203
      %p206 = scmp.ne.s32.totalorder %s189, %s205
      %p207 = scmp.eq.s32.totalorder %s27, 0
      %p208 = por %p206, %p207
      %p209 = scmp.le.s32.totalorder 1, %s21
      %p210 = scmp.lt.s32.totalorder %s21, 3
      %p211 = pnand %p209, %p210
      %p212 = pneg %p211
      // Predicated region
      $region9: #{tpu_custom_call.1} parent=5 // pred_check
        _
      $region10: #{tpu_custom_call.1} parent=5 // pred_check_branch
        %214 = sbr.rel (%p211) target = $region12
      $region11: #{tpu_custom_call.1} parent=5 // pred_region
        %s215 = ssub.s32 %s21, 1
        // Predicated region
        $region13: #{tpu_custom_call.1} parent=11 // pred_check
          %p216 = pneg %p82
        $region14: #{tpu_custom_call.1} parent=11 // pred_check_branch
          %218 = sbr.rel (%p216) target = $region16
        $region15: #{tpu_custom_call.1} parent=11 // pred_region
          _
        $region16: #{tpu_custom_call.1} parent=11 // pred_fallthru
          _
        // Predicated region
        $region17: #{tpu_custom_call.1} parent=11 // pred_check
          %p219 = pneg %p103
        $region18: #{tpu_custom_call.1} parent=11 // pred_check_branch
          %221 = sbr.rel (%p219) target = $region20
        $region19: #{tpu_custom_call.1} parent=11 // pred_region
          _
        $region20: #{tpu_custom_call.1} parent=11 // pred_fallthru
          _
        // Predicated region
        $region21: #{tpu_custom_call.1} parent=11 // pred_check
          %p222 = pneg %p124
        $region22: #{tpu_custom_call.1} parent=11 // pred_check_branch
          %224 = sbr.rel (%p222) target = $region24
        $region23: #{tpu_custom_call.1} parent=11 // pred_region
          _
        $region24: #{tpu_custom_call.1} parent=11 // pred_fallthru
          _
        // Predicated region
        $region25: #{tpu_custom_call.1} parent=11 // pred_check
          %p225 = pneg %p145
        $region26: #{tpu_custom_call.1} parent=11 // pred_check_branch
          %227 = sbr.rel (%p225) target = $region28
        $region27: #{tpu_custom_call.1} parent=11 // pred_region
          _
        $region28: #{tpu_custom_call.1} parent=11 // pred_fallthru
          _
      $region12: #{tpu_custom_call.1} parent=5 // pred_fallthru
        _
      %p228 = scmp.lt.s32.totalorder %s21, 2
      // Predicated region
      $region29: #{tpu_custom_call.1} parent=5 // pred_check
        %p229 = pneg %p228
      $region30: #{tpu_custom_call.1} parent=5 // pred_check_branch
        %231 = sbr.rel (%p229) target = $region32
      $region31: #{tpu_custom_call.1} parent=5 // pred_region
        // Predicated region
        $region33: #{tpu_custom_call.1} parent=31 // pred_check
          %p232 = pneg %p55
        $region34: #{tpu_custom_call.1} parent=31 // pred_check_branch
          %234 = sbr.rel (%p232) target = $region36
        $region35: #{tpu_custom_call.1} parent=31 // pred_region
          %s235 = smul.u32 2, %s29
          %p236 = scmp.lt.s32.totalorder %s28, 1
          %s237 = scalar_select %p236, %s28, 1
          %p238 = scmp.lt.s32.totalorder %s235, 1
          %s239 = scalar_select %p238, %s235, 1
          %s240 = smul.addr %s237, 2
          %s241 = sadd.s32 %s239, %s240
          %s242 = smul.addr %s241, 8
          %s243 = scalar_lea.vmem %s1, %s242
          %s244 = smul.u32 2, %s29
        $region36: #{tpu_custom_call.1} parent=31 // pred_fallthru
          _
      $region32: #{tpu_custom_call.1} parent=5 // pred_fallthru
        _
      %p245 = scmp.le.s32.totalorder 1, %s21
      %p246 = scmp.lt.s32.totalorder %s21, 3
      %p247 = pnand %p245, %p246
      %p248 = pneg %p247
      // Predicated region
      $region37: #{tpu_custom_call.1} parent=5 // pred_check
        _
      $region38: #{tpu_custom_call.1} parent=5 // pred_check_branch
        %250 = sbr.rel (%p247) target = $region40
      $region39: #{tpu_custom_call.1} parent=5 // pred_region
        %s251 = ssub.s32 %s21, 1
        %s252 = smul.u32 2, %s31
        %p253 = scmp.lt.s32.totalorder %s30, 1
        %s254 = scalar_select %p253, %s30, 1
        %p255 = scmp.lt.s32.totalorder %s252, 1
        %s256 = scalar_select %p255, %s252, 1
        %s257 = smul.addr %s254, 2
        %s258 = sadd.s32 %s256, %s257
        %s259 = smul.addr %s258, 8
        %s260 = scalar_lea.vmem %s1, %s259
        %p261 = pneg %p61
        %p262 = pneg %p58
        %p263 = pneg %p82
        %p264 = pneg %p79
        %p265 = pneg %p103
        %p266 = pneg %p100
        %p267 = pneg %p124
        %p268 = pneg %p121
        %p269 = pneg %p145
        %p270 = pneg %p142
        %p271 = pneg %p173
        %p272 = pneg %p170
        %s273 = sand.u32 %s160, 1
        %s274 = scalar_lea.sflag [#allocation5], %s273
        %s275 = sand.u32 %s160, 1
        %s276 = smul.addr %s275, 16
        %s277 = scalar_lea.vmem [#allocation4], %s276
        %p278 = pneg %p201
        %p279 = pneg %p198
        %s280 = sand.u32 %s188, 1
        %s281 = scalar_lea.sflag [#allocation7], %s280
        %s282 = sand.u32 %s188, 1
        %s283 = smul.addr %s282, 8
        %s284 = scalar_lea.vmem [#allocation6], %s283
        %s285 = smul.u32 2, %s31
        %p286 = scmp.lt.s32.totalorder %s30, 1
        %s287 = scalar_select %p286, %s30, 1
        %p288 = scmp.lt.s32.totalorder %s285, 1
        %s289 = scalar_select %p288, %s285, 1
        %s290 = smul.addr %s287, 2
        %s291 = sadd.s32 %s289, %s290
        %s292 = smul.addr %s291, 8
        %s293 = scalar_lea.vmem %s1, %s292
        %s294 = smul.u32 2, %s31
        %s295 = smul.u32 2, %s31
        %s296 = smul.u32 2, %s31
        %s297 = sld [smem:[#allocation3]]
        %s298 = sadd.s32 %s30, %s31
        %v299 = vld [vmem:[%s2] sm:$0xff]
        %v300 = vld [vmem:[%s2 + $0x8] sm:$0xff]
        %v301 = vld [vmem:[%s293] sm:$0xff]
        %v302 = vld [vmem:[%s293 + $0x8] sm:$0xff]
        %v303 = vld [vmem:[%s3] sm:$0xff]
        %v304 = vld [vmem:[%s3 + $0x8] sm:$0xff]
        %306 = vset.pattern.permute.xlu0 0
        %307 = vperm.xlu0 %306, %v303
        %v308 = vpop.permute.xlu0 %307
        %311 = vset.pattern.permute.xlu0 0
        %312 = vperm.xlu0 %311, %v304
        %v313 = vpop.permute.xlu0 %312
        %vm315 = vcmask 64512
        %v317 = vsel %vm315, %v299, 0
        %v320 = vsel %vm315, %v300, 0
        %322 = vmatprep.subr.mxu0 %v302
        %323 = vmatpush1.msra.mxu0 %v301
        %324 = vmatprep.subr.mxu0 0.0
        %325 = vmatpush1.msra.mxu0 0.0
        %326 = vmatprep.subr.mxu0 0.0
        %327 = vmatpush1.msra.mxu0 0.0
        %328 = vmatprep.subr.mxu0 0.0
        %329 = vmatpush1.msra.mxu0 0.0
        %330 = vmatprep.subr.mxu0 0.0
        %331 = vmatpush1.msra.mxu0 0.0
        %332 = vmatprep.subr.mxu0 0.0
        %333 = vmatpush1.msra.mxu0 0.0
        %334 = vmatprep.subr.mxu0 0.0
        %335 = vmatpush1.msra.mxu0 0.0
        %336 = vmatprep.subr.mxu0 0.0
        %337 = vmatpush1.msra.mxu0 0.0
        %338 = vmatprep.subr.mxu0 0.0
        %339 = vmatpush1.msra.mxu0 0.0
        %340 = vmatprep.subr.mxu0 0.0
        %341 = vmatpush1.msra.mxu0 0.0
        %342 = vmatprep.subr.mxu0 0.0
        %343 = vmatpush1.msra.mxu0 0.0
        %344 = vmatprep.subr.mxu0 0.0
        %345 = vmatpush1.msra.mxu0 0.0
        %346 = vmatprep.subr.mxu0 0.0
        %347 = vmatpush1.msra.mxu0 0.0
        %348 = vmatprep.subr.mxu0 0.0
        %349 = vmatpush1.msra.mxu0 0.0
        %350 = vmatprep.subr.mxu0 0.0
        %351 = vmatpush1.msra.mxu0 0.0
        %352 = vmatprep.subr.mxu0 0.0
        %353 = vmatpush1.msra.mxu0 0.0
        %354 = vmatprep.subr.mxu0 0.0
        %355 = vmatpush1.msra.mxu0 0.0
        %356 = vmatprep.subr.mxu0 0.0
        %357 = vmatpush1.msra.mxu0 0.0
        %358 = vmatprep.subr.mxu0 0.0
        %359 = vmatpush1.msra.mxu0 0.0
        %360 = vmatprep.subr.mxu0 0.0
        %361 = vmatpush1.msra.mxu0 0.0
        %362 = vmatprep.subr.mxu0 0.0
        %363 = vmatpush1.msra.mxu0 0.0
        %364 = vmatprep.subr.mxu0 0.0
        %365 = vmatpush1.msra.mxu0 0.0
        %366 = vmatprep.subr.mxu0 0.0
        %367 = vmatpush1.msra.mxu0 0.0
        %368 = vmatprep.subr.mxu0 0.0
        %369 = vmatpush1.msra.mxu0 0.0
        %370 = vmatprep.subr.mxu0 0.0
        %371 = vmatpush1.msra.mxu0 0.0
        %372 = vmatprep.subr.mxu0 0.0
        %373 = vmatpush1.msra.mxu0 0.0
        %374 = vmatprep.subr.mxu0 0.0
        %375 = vmatpush1.msra.mxu0 0.0
        %376 = vmatprep.subr.mxu0 0.0
        %377 = vmatpush1.msra.mxu0 0.0
        %378 = vmatprep.subr.mxu0 0.0
        %379 = vmatpush1.msra.mxu0 0.0
        %380 = vmatprep.subr.mxu0 0.0
        %381 = vmatpush1.msra.mxu0 0.0
        %382 = vmatprep.subr.mxu0 0.0
        %383 = vmatpush1.msra.mxu0 0.0
        %384 = vmatprep.subr.mxu0 0.0
        %385 = vmatpush1.msra.mxu0 0.0
        %386 = vmatprep.mubr.f32.mxu0 0.0
        %387 = vmatmul.mubr.f32.gmra.mrb[0].mxu0 %v317
        %v388 = vpop.f32.mrb[0].mxu0
        %v389 = vadd.f32 %v308, %v388
        %v390 = vpop.f32.mrb[0].mxu0
        %v391 = vadd.f32 %v308, %v390
        %392 = vmatprep.mubr.f32.mxu0 0.0
        %393 = vmatmul.mubr.f32.gmra.mrb[0].mxu0 %v320
        %v394 = vpop.f32.mrb[0].mxu0
        %v395 = vadd.f32 %v313, %v394
        %v396 = vpop.f32.mrb[0].mxu0
        %v397 = vadd.f32 %v313, %v396
        %398 = vdwg.mxu0
        %v399 = vmax.f32 %v389, %v395
        %v400 = vrot.slane %v399, 4
        %v401 = vmax.f32 %v399, %v400
        %v402 = vrot.slane %v401, 2
        %v403 = vmax.f32 %v401, %v402
        %v404 = vrot.slane %v403, 1
        %v405 = vmax.f32 %v403, %v404
        %v406 = vmax.f32 %v391, %v397
        %v407 = vrot.slane %v406, 4
        %v408 = vmax.f32 %v406, %v407
        %v409 = vrot.slane %v408, 2
        %v410 = vmax.f32 %v408, %v409
        %v411 = vrot.slane %v410, 1
        %v412 = vmax.f32 %v410, %v411
        %v413 = vlaneseq
        %v414 = vshrl.u32 %v413, 7
        %v415 = vadd.s32 %v414, 8
        %v416 = vcvt.s32.f32 %v414
        %v417 = vcvt.s32.f32 %v415
        %vm418 = vcmp.eq.f32.partialorder %v389, %v405
        %vm419 = vcmp.eq.f32.partialorder %v391, %v412
        %vm420 = vcmp.eq.f32.partialorder %v395, %v405
        %vm421 = vcmp.eq.f32.partialorder %v397, %v412
        %v422 = vsel %vm418, %v416, 16.0
        %v423 = vsel %vm419, %v416, 16.0
        %v424 = vsel %vm420, %v417, 16.0
        %v425 = vsel %vm421, %v417, 16.0
        %v426 = vmin.f32 %v422, %v424
        %v427 = vrot.slane %v426, 4
        %v428 = vmin.f32 %v426, %v427
        %v429 = vrot.slane %v428, 2
        %v430 = vmin.f32 %v428, %v429
        %v431 = vrot.slane %v430, 1
        %v432 = vmin.f32 %v430, %v431
        %v433 = vmin.f32 %v423, %v425
        %v434 = vrot.slane %v433, 4
        %v435 = vmin.f32 %v433, %v434
        %v436 = vrot.slane %v435, 2
        %v437 = vmin.f32 %v435, %v436
        %v438 = vrot.slane %v437, 1
        %v439 = vmin.f32 %v437, %v438
        %v440 = vcvt.f32.s32.to.zero.pseudo %v432
        %v441 = vcvt.f32.s32.to.zero.pseudo %v439
        %v442 = vsub.f32 %v389, %v405
        %v443 = vsub.f32 %v391, %v412
        %v444 = vsub.f32 %v395, %v405
        %v445 = vsub.f32 %v397, %v412
        %v446 = vmul.f32 %v442, 1.442695
        %v447 = vpow.pop %v446
        %v448 = vmul.f32 %v443, 1.442695
        %v449 = vpow.pop %v448
        %v450 = vmul.f32 %v444, 1.442695
        %v451 = vpow.pop %v450
        %v452 = vmul.f32 %v445, 1.442695
        %v453 = vpow.pop %v452
        %v454 = vadd.f32 %v447, %v451
        %v455 = vrot.slane %v454, 4
        %v456 = vadd.f32 %v454, %v455
        %v457 = vrot.slane %v456, 2
        %v458 = vadd.f32 %v456, %v457
        %v459 = vrot.slane %v458, 1
        %v460 = vadd.f32 %v458, %v459
        %v461 = vadd.f32 %v449, %v453
        %v462 = vrot.slane %v461, 4
        %v463 = vadd.f32 %v461, %v462
        %v464 = vrot.slane %v463, 2
        %v465 = vadd.f32 %v463, %v464
        %v466 = vrot.slane %v465, 1
        %v467 = vadd.f32 %v465, %v466
        %v468 = vlog2.pop %v460
        %v469 = vmul.f32 %v468, 0.6931472
        %v470 = vlog2.pop %v467
        %v471 = vmul.f32 %v470, 0.6931472
        %v472 = vsub.f32 %v442, %v469
        %v473 = vsub.f32 %v443, %v471
        %v474 = vsub.f32 %v444, %v469
        %v475 = vsub.f32 %v445, %v471
        %v476 = vrcp.pop %v460
        %v477 = vmul.f32 %v447, %v476
        %v478 = vrcp.pop %v467
        %v479 = vmul.f32 %v449, %v478
        %v480 = vmul.f32 %v451, %v476
        %v481 = vmul.f32 %v453, %v478
        %v482 = vmul.f32 %v477, %v472
        %v483 = vmul.f32 %v479, %v473
        %v484 = vmul.f32 %v480, %v474
        %v485 = vmul.f32 %v481, %v475
        %v486 = vadd.f32 %v482, %v484
        %v487 = vrot.slane %v486, 4
        %v488 = vadd.f32 %v486, %v487
        %v489 = vrot.slane %v488, 2
        %v490 = vadd.f32 %v488, %v489
        %v491 = vrot.slane %v490, 1
        %v492 = vadd.f32 %v490, %v491
        %v493 = vadd.f32 %v483, %v485
        %v494 = vrot.slane %v493, 4
        %v495 = vadd.f32 %v493, %v494
        %v496 = vrot.slane %v495, 2
        %v497 = vadd.f32 %v495, %v496
        %v498 = vrot.slane %v497, 1
        %v499 = vadd.f32 %v497, %v498
        %v500 = vadd.f32 %v492, 2.7725887
        %v501 = vadd.f32 %v499, 2.7725887
        %v502 = vmul.u32 %v414, 256
        %v503 = vmul.u32 %v415, 256
        %v504 = vlaneseq
        %v505 = vand.u32 %v504, 127
        %v506 = vadd.s32 %v505, 128
        %v507 = vadd.s32 %v502, %v505
        %v508 = vadd.s32 %v502, %v506
        %v509 = vadd.s32 %v503, %v505
        %v510 = vadd.s32 %v503, %v506
        %s511 = smul.u32 %s297, 2654435769
        %v512 = vstv %s511
        %v513 = vadd.s32 %v507, %v512
        %v514 = vadd.s32 %v508, %v512
        %v515 = vadd.s32 %v509, %v512
        %v516 = vadd.s32 %v510, %v512
        %s517 = smul.u32 %s298, 198677718
        %v518 = vstv %s517
        %v519 = vadd.s32 %v513, %v518
        %v520 = vadd.s32 %v514, %v518
        %v521 = vadd.s32 %v515, %v518
        %v522 = vadd.s32 %v516, %v518
        %v523 = vshrl.u32 %v519, 16
        %v524 = vshrl.u32 %v520, 16
        %v525 = vshrl.u32 %v521, 16
        %v526 = vshrl.u32 %v522, 16
        %v527 = vxor.u32 %v519, %v523
        %v528 = vxor.u32 %v520, %v524
        %v529 = vxor.u32 %v521, %v525
        %v530 = vxor.u32 %v522, %v526
        %v531 = vmul.u32 %v527, 2146121005
        %v532 = vmul.u32 %v528, 2146121005
        %v533 = vmul.u32 %v529, 2146121005
        %v534 = vmul.u32 %v530, 2146121005
        %v535 = vshrl.u32 %v531, 15
        %v536 = vshrl.u32 %v532, 15
        %v537 = vshrl.u32 %v533, 15
        %v538 = vshrl.u32 %v534, 15
        %v539 = vxor.u32 %v531, %v535
        %v540 = vxor.u32 %v532, %v536
        %v541 = vxor.u32 %v533, %v537
        %v542 = vxor.u32 %v534, %v538
        %v543 = vmul.u32 %v539, 2221713035
        %v544 = vmul.u32 %v540, 2221713035
        %v545 = vmul.u32 %v541, 2221713035
        %v546 = vmul.u32 %v542, 2221713035
        %v547 = vshrl.u32 %v543, 16
        %v548 = vshrl.u32 %v544, 16
        %v549 = vshrl.u32 %v545, 16
        %v550 = vshrl.u32 %v546, 16
        %v551 = vxor.u32 %v543, %v547
        %v552 = vxor.u32 %v544, %v548
        %v553 = vxor.u32 %v545, %v549
        %v554 = vxor.u32 %v546, %v550
        %v555 = vshrl.u32 %v551, 8
        %v556 = vshrl.u32 %v552, 8
        %v557 = vshrl.u32 %v553, 8
        %v558 = vshrl.u32 %v554, 8
        %v559 = vcvt.s32.f32 %v555
        %v560 = vcvt.s32.f32 %v556
        %v561 = vcvt.s32.f32 %v557
        %v562 = vcvt.s32.f32 %v558
        %v563 = vmul.f32 %v559, 5.9604645e-08
        %v564 = vmul.f32 %v560, 5.9604645e-08
        %v565 = vmul.f32 %v561, 5.9604645e-08
        %v566 = vmul.f32 %v562, 5.9604645e-08
        %v567 = vadd.f32 %v563, 2.9802322e-08
        %v568 = vadd.f32 %v564, 2.9802322e-08
        %v569 = vadd.f32 %v565, 2.9802322e-08
        %v570 = vadd.f32 %v566, 2.9802322e-08
        %v571 = vlog2.pop %v567
        %v572 = vmul.f32 %v571, 0.6931472
        %v573 = vlog2.pop %v568
        %v574 = vmul.f32 %v573, 0.6931472
        %v575 = vlog2.pop %v569
        %v576 = vmul.f32 %v575, 0.6931472
        %v577 = vlog2.pop %v570
        %v578 = vmul.f32 %v577, 0.6931472
        %v579 = vsub.f32 0.0, %v572
        %v580 = vsub.f32 0.0, %v574
        %v581 = vsub.f32 0.0, %v576
        %v582 = vsub.f32 0.0, %v578
        %v583 = vrcp.pop %v579
        %v584 = vmul.f32 %v447, %v583
        %v585 = vrcp.pop %v580
        %v586 = vmul.f32 %v449, %v585
        %v587 = vrcp.pop %v581
        %v588 = vmul.f32 %v451, %v587
        %v589 = vrcp.pop %v582
        %v590 = vmul.f32 %v453, %v589
        %v591 = vmax.f32 %v584, %v588
        %v592 = vrot.slane %v591, 4
        %v593 = vmax.f32 %v591, %v592
        %v594 = vrot.slane %v593, 2
        %v595 = vmax.f32 %v593, %v594
        %v596 = vrot.slane %v595, 1
        %v597 = vmax.f32 %v595, %v596
        %v598 = vmax.f32 %v586, %v590
        %v599 = vrot.slane %v598, 4
        %v600 = vmax.f32 %v598, %v599
        %v601 = vrot.slane %v600, 2
        %v602 = vmax.f32 %v600, %v601
        %v603 = vrot.slane %v602, 1
        %v604 = vmax.f32 %v602, %v603
        %vm605 = vcmp.eq.f32.partialorder %v584, %v597
        %vm606 = vcmp.eq.f32.partialorder %v586, %v604
        %vm607 = vcmp.eq.f32.partialorder %v588, %v597
        %vm608 = vcmp.eq.f32.partialorder %v590, %v604
        %v609 = vsel %vm605, %v416, 16.0
        %v610 = vsel %vm606, %v416, 16.0
        %v611 = vsel %vm607, %v417, 16.0
        %v612 = vsel %vm608, %v417, 16.0
        %v613 = vmin.f32 %v609, %v611
        %v614 = vrot.slane %v613, 4
        %v615 = vmin.f32 %v613, %v614
        %v616 = vrot.slane %v615, 2
        %v617 = vmin.f32 %v615, %v616
        %v618 = vrot.slane %v617, 1
        %v619 = vmin.f32 %v617, %v618
        %v620 = vmin.f32 %v610, %v612
        %v621 = vrot.slane %v620, 4
        %v622 = vmin.f32 %v620, %v621
        %v623 = vrot.slane %v622, 2
        %v624 = vmin.f32 %v622, %v623
        %v625 = vrot.slane %v624, 1
        %v626 = vmin.f32 %v624, %v625
        %v627 = vcvt.f32.s32.to.zero.pseudo %v619
        %v628 = vcvt.f32.s32.to.zero.pseudo %v626
        %s629 = smul.u32 %s298, 2
        %s630 = sadd.s32 %s629, 1
        %s631 = smul.u32 %s630, 2246822507
        %v632 = vstv %s631
        %v633 = vadd.s32 %v513, %v632
        %v634 = vadd.s32 %v514, %v632
        %v635 = vadd.s32 %v515, %v632
        %v636 = vadd.s32 %v516, %v632
        %v637 = vshrl.u32 %v633, 16
        %v638 = vshrl.u32 %v634, 16
        %v639 = vshrl.u32 %v635, 16
        %v640 = vshrl.u32 %v636, 16
        %v641 = vxor.u32 %v633, %v637
        %v642 = vxor.u32 %v634, %v638
        %v643 = vxor.u32 %v635, %v639
        %v644 = vxor.u32 %v636, %v640
        %v645 = vmul.u32 %v641, 2146121005
        %v646 = vmul.u32 %v642, 2146121005
        %v647 = vmul.u32 %v643, 2146121005
        %v648 = vmul.u32 %v644, 2146121005
        %v649 = vshrl.u32 %v645, 15
        %v650 = vshrl.u32 %v646, 15
        %v651 = vshrl.u32 %v647, 15
        %v652 = vshrl.u32 %v648, 15
        %v653 = vxor.u32 %v645, %v649
        %v654 = vxor.u32 %v646, %v650
        %v655 = vxor.u32 %v647, %v651
        %v656 = vxor.u32 %v648, %v652
        %v657 = vmul.u32 %v653, 2221713035
        %v658 = vmul.u32 %v654, 2221713035
        %v659 = vmul.u32 %v655, 2221713035
        %v660 = vmul.u32 %v656, 2221713035
        %v661 = vshrl.u32 %v657, 16
        %v662 = vshrl.u32 %v658, 16
        %v663 = vshrl.u32 %v659, 16
        %v664 = vshrl.u32 %v660, 16
        %v665 = vxor.u32 %v657, %v661
        %v666 = vxor.u32 %v658, %v662
        %v667 = vxor.u32 %v659, %v663
        %v668 = vxor.u32 %v660, %v664
        %v669 = vshrl.u32 %v665, 8
        %v670 = vshrl.u32 %v666, 8
        %v671 = vshrl.u32 %v667, 8
        %v672 = vshrl.u32 %v668, 8
        %v673 = vcvt.s32.f32 %v669
        %v674 = vcvt.s32.f32 %v670
        %v675 = vcvt.s32.f32 %v671
        %v676 = vcvt.s32.f32 %v672
        %v677 = vmul.f32 %v673, 5.9604645e-08
        %v678 = vmul.f32 %v674, 5.9604645e-08
        %v679 = vmul.f32 %v675, 5.9604645e-08
        %v680 = vmul.f32 %v676, 5.9604645e-08
        %v681 = vadd.f32 %v677, 2.9802322e-08
        %v682 = vadd.f32 %v678, 2.9802322e-08
        %v683 = vadd.f32 %v679, 2.9802322e-08
        %v684 = vadd.f32 %v680, 2.9802322e-08
        %v685 = vlog2.pop %v681
        %v686 = vmul.f32 %v685, 0.6931472
        %v687 = vlog2.pop %v682
        %v688 = vmul.f32 %v687, 0.6931472
        %v689 = vlog2.pop %v683
        %v690 = vmul.f32 %v689, 0.6931472
        %v691 = vlog2.pop %v684
        %v692 = vmul.f32 %v691, 0.6931472
        %v693 = vsub.f32 0.0, %v686
        %v694 = vsub.f32 0.0, %v688
        %v695 = vsub.f32 0.0, %v690
        %v696 = vsub.f32 0.0, %v692
        %v697 = vlog2.pop %v693
        %v698 = vmul.f32 %v697, 0.6931472
        %v699 = vlog2.pop %v694
        %v700 = vmul.f32 %v699, 0.6931472
        %v701 = vlog2.pop %v695
        %v702 = vmul.f32 %v701, 0.6931472
        %v703 = vlog2.pop %v696
        %v704 = vmul.f32 %v703, 0.6931472
        %v705 = vsub.f32 %v389, %v698
        %v706 = vsub.f32 %v391, %v700
        %v707 = vsub.f32 %v395, %v702
        %v708 = vsub.f32 %v397, %v704
        %v709 = vmax.f32 %v705, %v707
        %v710 = vrot.slane %v709, 4
        %v711 = vmax.f32 %v709, %v710
        %v712 = vrot.slane %v711, 2
        %v713 = vmax.f32 %v711, %v712
        %v714 = vrot.slane %v713, 1
        %v715 = vmax.f32 %v713, %v714
        %v716 = vmax.f32 %v706, %v708
        %v717 = vrot.slane %v716, 4
        %v718 = vmax.f32 %v716, %v717
        %v719 = vrot.slane %v718, 2
        %v720 = vmax.f32 %v718, %v719
        %v721 = vrot.slane %v720, 1
        %v722 = vmax.f32 %v720, %v721
        %vm723 = vcmp.eq.f32.partialorder %v705, %v715
        %vm724 = vcmp.eq.f32.partialorder %v706, %v722
        %vm725 = vcmp.eq.f32.partialorder %v707, %v715
        %vm726 = vcmp.eq.f32.partialorder %v708, %v722
        %v727 = vsel %vm723, %v416, 16.0
        %v728 = vsel %vm724, %v416, 16.0
        %v729 = vsel %vm725, %v417, 16.0
        %v730 = vsel %vm726, %v417, 16.0
        %v731 = vmin.f32 %v727, %v729
        %v732 = vrot.slane %v731, 4
        %v733 = vmin.f32 %v731, %v732
        %v734 = vrot.slane %v733, 2
        %v735 = vmin.f32 %v733, %v734
        %v736 = vrot.slane %v735, 1
        %v737 = vmin.f32 %v735, %v736
        %v738 = vmin.f32 %v728, %v730
        %v739 = vrot.slane %v738, 4
        %v740 = vmin.f32 %v738, %v739
        %v741 = vrot.slane %v740, 2
        %v742 = vmin.f32 %v740, %v741
        %v743 = vrot.slane %v742, 1
        %v744 = vmin.f32 %v742, %v743
        %v745 = vcvt.f32.s32.to.zero.pseudo %v737
        %v746 = vcvt.f32.s32.to.zero.pseudo %v744
        %v747 = vsub.f32 %v705, %v715
        %v748 = vsub.f32 %v706, %v722
        %v749 = vsub.f32 %v707, %v715
        %v750 = vsub.f32 %v708, %v722
        %v751 = vmul.f32 %v747, 1.442695
        %v752 = vpow.pop %v751
        %v753 = vmul.f32 %v748, 1.442695
        %v754 = vpow.pop %v753
        %v755 = vmul.f32 %v749, 1.442695
        %v756 = vpow.pop %v755
        %v757 = vmul.f32 %v750, 1.442695
        %v758 = vpow.pop %v757
        %v759 = vadd.f32 %v752, %v756
        %v760 = vrot.slane %v759, 4
        %v761 = vadd.f32 %v759, %v760
        %v762 = vrot.slane %v761, 2
        %v763 = vadd.f32 %v761, %v762
        %v764 = vrot.slane %v763, 1
        %v765 = vadd.f32 %v763, %v764
        %v766 = vadd.f32 %v754, %v758
        %v767 = vrot.slane %v766, 4
        %v768 = vadd.f32 %v766, %v767
        %v769 = vrot.slane %v768, 2
        %v770 = vadd.f32 %v768, %v769
        %v771 = vrot.slane %v770, 1
        %v772 = vadd.f32 %v770, %v771
        %v773 = vrcp.pop %v765
        %v774 = vmul.f32 %v752, %v773
        %v775 = vrcp.pop %v772
        %v776 = vmul.f32 %v754, %v775
        %v777 = vmul.f32 %v756, %v773
        %v778 = vmul.f32 %v758, %v775
        %v779 = vld [vmem:[%s4] sm:$0xff]
        %v780 = vld [vmem:[%s5] sm:$0xff]
        %782 = vset.pattern.permute.xlu0 0
        %783 = vperm.xlu0 %782, %v780
        %v784 = vpop.permute.xlu0 %783
        %vm786 = vcmask 130048
        %v788 = vsel %vm786, %v779, 0
        %790 = vmatprep.subr.mxu0 %v776
        %791 = vmatpush1.msra.mxu0 %v774
        %792 = vmatprep.subr.mxu0 %v778
        %793 = vmatpush1.msra.mxu0 %v777
        %794 = vmatprep.subr.mxu0 0.0
        %795 = vmatpush1.msra.mxu0 0.0
        %796 = vmatprep.subr.mxu0 0.0
        %797 = vmatpush1.msra.mxu0 0.0
        %798 = vmatprep.subr.mxu0 0.0
        %799 = vmatpush1.msra.mxu0 0.0
        %800 = vmatprep.subr.mxu0 0.0
        %801 = vmatpush1.msra.mxu0 0.0
        %802 = vmatprep.subr.mxu0 0.0
        %803 = vmatpush1.msra.mxu0 0.0
        %804 = vmatprep.subr.mxu0 0.0
        %805 = vmatpush1.msra.mxu0 0.0
        %806 = vmatprep.subr.mxu0 0.0
        %807 = vmatpush1.msra.mxu0 0.0
        %808 = vmatprep.subr.mxu0 0.0
        %809 = vmatpush1.msra.mxu0 0.0
        %810 = vmatprep.subr.mxu0 0.0
        %811 = vmatpush1.msra.mxu0 0.0
        %812 = vmatprep.subr.mxu0 0.0
        %813 = vmatpush1.msra.mxu0 0.0
        %814 = vmatprep.subr.mxu0 0.0
        %815 = vmatpush1.msra.mxu0 0.0
        %816 = vmatprep.subr.mxu0 0.0
        %817 = vmatpush1.msra.mxu0 0.0
        %818 = vmatprep.subr.mxu0 0.0
        %819 = vmatpush1.msra.mxu0 0.0
        %820 = vmatprep.subr.mxu0 0.0
        %821 = vmatpush1.msra.mxu0 0.0
        %822 = vmatprep.subr.mxu0 0.0
        %823 = vmatpush1.msra.mxu0 0.0
        %824 = vmatprep.subr.mxu0 0.0
        %825 = vmatpush1.msra.mxu0 0.0
        %826 = vmatprep.subr.mxu0 0.0
        %827 = vmatpush1.msra.mxu0 0.0
        %828 = vmatprep.subr.mxu0 0.0
        %829 = vmatpush1.msra.mxu0 0.0
        %830 = vmatprep.subr.mxu0 0.0
        %831 = vmatpush1.msra.mxu0 0.0
        %832 = vmatprep.subr.mxu0 0.0
        %833 = vmatpush1.msra.mxu0 0.0
        %834 = vmatprep.subr.mxu0 0.0
        %835 = vmatpush1.msra.mxu0 0.0
        %836 = vmatprep.subr.mxu0 0.0
        %837 = vmatpush1.msra.mxu0 0.0
        %838 = vmatprep.subr.mxu0 0.0
        %839 = vmatpush1.msra.mxu0 0.0
        %840 = vmatprep.subr.mxu0 0.0
        %841 = vmatpush1.msra.mxu0 0.0
        %842 = vmatprep.subr.mxu0 0.0
        %843 = vmatpush1.msra.mxu0 0.0
        %844 = vmatprep.subr.mxu0 0.0
        %845 = vmatpush1.msra.mxu0 0.0
        %846 = vmatprep.subr.mxu0 0.0
        %847 = vmatpush1.msra.mxu0 0.0
        %848 = vmatprep.subr.mxu0 0.0
        %849 = vmatpush1.msra.mxu0 0.0
        %850 = vmatprep.subr.mxu0 0.0
        %851 = vmatpush1.msra.mxu0 0.0
        %852 = vmatprep.subr.mxu0 0.0
        %853 = vmatpush1.msra.mxu0 0.0
        %854 = vmatprep.mubr.f32.mxu0 0.0
        %855 = vmatmul.mubr.f32.gmra.mrb[0].mxu0 %v788
        %v856 = vpop.f32.mrb[0].mxu0
        %v857 = vadd.f32 %v784, %v856
        %v858 = vpop.f32.mrb[0].mxu0
        %v859 = vadd.f32 %v784, %v858
        %860 = vdwg.mxu0
        %861 = vst [vmem:[%s277] sm:$0xff] %v857
        %862 = vst [vmem:[%s277 + $0x8] sm:$0xff] %v859
        %v865 = vcombine.low %v500, %v501
        %v867 = vunpack.c.l.s4 1966171168
        %v868 = vunpack.c.0.s8 %v867
        %v869 = vlaneseq
        %v870 = vshrl.u32 %v869, 7
        %v871 = vsub.s32 %v868, %v870
        %v872 = vrot.slane %v865, %v871
        %v874 = vunpack.c.l.s4 1966171168
        %v875 = vunpack.c.0.s8 %v874
        %v876 = vlaneseq
        %v877 = vshrl.u32 %v876, 7
        %v878 = vsub.s32 %v875, %v877
        %v879 = vrot.slane %v872, %v878
        %v880 = vlaneseq
        %vm881 = vcmp.ge.s32.totalorder %v880, 0
        %vm882 = vcmp.lt.s32.totalorder %v880, 256
        %vm883 = vmand %vm881, %vm882
        %884 = vst.msk [vmem:[%s284] ss:$4 sm:$0x3] %vm883, %v879
        %v885 = vcombine.low %v745, %v746
        %v887 = vunpack.c.l.s4 1966171168
        %v888 = vunpack.c.0.s8 %v887
        %v889 = vlaneseq
        %v890 = vshrl.u32 %v889, 7
        %v891 = vsub.s32 %v888, %v890
        %v892 = vrot.slane %v885, %v891
        %v894 = vunpack.c.l.s4 1966171168
        %v895 = vunpack.c.0.s8 %v894
        %v896 = vlaneseq
        %v897 = vshrl.u32 %v896, 7
        %v898 = vsub.s32 %v895, %v897
        %v899 = vrot.slane %v892, %v898
        %s900 = scalar_lea.vmem %s284, 1 [#allocation6]
        %901 = vst.msk [vmem:[%s900] ss:$4 sm:$0x3] %vm883, %v899
        %v902 = vcombine.low %v440, %v441
        %v904 = vunpack.c.l.s4 1966171168
        %v905 = vunpack.c.0.s8 %v904
        %v906 = vlaneseq
        %v907 = vshrl.u32 %v906, 7
        %v908 = vsub.s32 %v905, %v907
        %v909 = vrot.slane %v902, %v908
        %v911 = vunpack.c.l.s4 1966171168
        %v912 = vunpack.c.0.s8 %v911
        %v913 = vlaneseq
        %v914 = vshrl.u32 %v913, 7
        %v915 = vsub.s32 %v912, %v914
        %v916 = vrot.slane %v909, %v915
        %s917 = scalar_lea.vmem %s284, 2 [#allocation6]
        %918 = vst.msk [vmem:[%s917] ss:$4 sm:$0x3] %vm883, %v916
        %v919 = vcombine.low %v627, %v628
        %v921 = vunpack.c.l.s4 1966171168
        %v922 = vunpack.c.0.s8 %v921
        %v923 = vlaneseq
        %v924 = vshrl.u32 %v923, 7
        %v925 = vsub.s32 %v922, %v924
        %v926 = vrot.slane %v919, %v925
        %v928 = vunpack.c.l.s4 1966171168
        %v929 = vunpack.c.0.s8 %v928
        %v930 = vlaneseq
        %v931 = vshrl.u32 %v930, 7
        %v932 = vsub.s32 %v929, %v931
        %v933 = vrot.slane %v926, %v932
        %s934 = scalar_lea.vmem %s284, 3 [#allocation6]
        %935 = vst.msk [vmem:[%s934] ss:$4 sm:$0x3] %vm883, %v933
        %s936 = sand.u32 %s160, 1
        %s937 = scalar_lea.sflag [#allocation5], %s936
        %s938 = sand.u32 %s160, 1
        %s939 = smul.addr %s938, 16
        %s940 = scalar_lea.vmem [#allocation4], %s939
        %s941 = sand.u32 %s188, 1
        %s942 = scalar_lea.sflag [#allocation7], %s941
        %s943 = sand.u32 %s188, 1
        %s944 = smul.addr %s943, 8
        %s945 = scalar_lea.vmem [#allocation6], %s944
        // Predicated region
        $region41: #{tpu_custom_call.1} parent=39 // pred_check
          %p946 = pneg %p170
        $region42: #{tpu_custom_call.1} parent=39 // pred_check_branch
          %948 = sbr.rel (%p946) target = $region44
        $region43: #{tpu_custom_call.1} parent=39 // pred_region
          %s949 = smul.u32 2, %s31
          %s951 = ssub.s32 256, 256
          %952 = vsyncadd %s937, %s951
          %s953 = smul.addr %s30, 2
          %s954 = sadd.s32 %s949, %s953
          %s955 = smul.addr %s954, 128
          %s956 = scalar_lea.hbm %s6, %s955
          %s958 = sshll.u32 %s940, 4
          %s959 = int_to_ptr.vmem [resolvable:$true] %s958
          %961 = dma.vmem_to_hbm [thread:$0]  %s959, 256, %s956, %s937
        $region44: #{tpu_custom_call.1} parent=39 // pred_fallthru
          _
        // Predicated region
        $region45: #{tpu_custom_call.1} parent=39 // pred_check
          %p962 = pneg %p198
        $region46: #{tpu_custom_call.1} parent=39 // pred_check_branch
          %964 = sbr.rel (%p962) target = $region48
        $region47: #{tpu_custom_call.1} parent=39 // pred_region
          %s965 = smul.u32 2, %s31
          %s967 = ssub.s32 128, 128
          %968 = vsyncadd %s942, %s967
          %s969 = smul.addr %s30, 2
          %s970 = sadd.s32 %s965, %s969
          %s971 = smul.addr %s970, 64
          %s972 = scalar_lea.hbm %s7, %s971
          %s974 = sshll.u32 %s945, 4
          %s975 = int_to_ptr.vmem [resolvable:$true] %s974
          %977 = dma.vmem_to_hbm [thread:$0]  %s975, 128, %s972, %s942
        $region48: #{tpu_custom_call.1} parent=39 // pred_fallthru
          _
      $region40: #{tpu_custom_call.1} parent=5 // pred_fallthru
        _
      %p978 = scmp.le.s32.totalorder 2, %s21
      // Predicated region
      $region49: #{tpu_custom_call.1} parent=5 // pred_check
        %p979 = pneg %p978
      $region50: #{tpu_custom_call.1} parent=5 // pred_check_branch
        %981 = sbr.rel (%p979) target = $region52
      $region51: #{tpu_custom_call.1} parent=5 // pred_region
        %s982 = ssub.s32 %s21, 2
        // Predicated region
        $region53: #{tpu_custom_call.1} parent=51 // pred_check
          %p983 = pneg %p176
        $region54: #{tpu_custom_call.1} parent=51 // pred_check_branch
          %985 = sbr.rel (%p983) target = $region56
        $region55: #{tpu_custom_call.1} parent=51 // pred_region
          %s986 = sand.u32 %s161, 1
          %s987 = scalar_lea.sflag [#allocation5], %s986
          %s988 = sand.u32 %s161, 1
          %s989 = smul.addr %s988, 16
          %s990 = scalar_lea.vmem [#allocation4], %s989
          %991 = dma.done %s987, 256
        $region56: #{tpu_custom_call.1} parent=51 // pred_fallthru
          _
        // Predicated region
        $region57: #{tpu_custom_call.1} parent=51 // pred_check
          %p992 = pneg %p204
        $region58: #{tpu_custom_call.1} parent=51 // pred_check_branch
          %994 = sbr.rel (%p992) target = $region60
        $region59: #{tpu_custom_call.1} parent=51 // pred_region
          %s995 = sand.u32 %s189, 1
          %s996 = scalar_lea.sflag [#allocation7], %s995
          %s997 = sand.u32 %s189, 1
          %s998 = smul.addr %s997, 8
          %s999 = scalar_lea.vmem [#allocation6], %s998
          %1000 = dma.done %s996, 128
        $region60: #{tpu_custom_call.1} parent=51 // pred_fallthru
          _
      $region52: #{tpu_custom_call.1} parent=5 // pred_fallthru
        _
    $region6: #{tpu_custom_call.1} parent=1 // loop_footer
      %s25 = sadd.s32 1, %s21
    $region7: #{tpu_custom_call.1} parent=1 // loop_footer_branch
      %20 = sbr.rel target = $region3
    $region8: #{tpu_custom_call.1} parent=1 // loop_exit
      _
    %1001 = vsyncpa [#allocation5], 1
    %s1002 = scalar_lea.sflag [#allocation5], 1
    %1003 = vsyncpa %s1002, 1
    %1004 = vsyncpa [#allocation7], 1
    %s1005 = scalar_lea.sflag [#allocation7], 1
    %1006 = vsyncpa %s1005, 1

</llo_original>
